<compile_context>
chip_gen: v5e
topology: v5e:2x2
jax: 0.10.0
libtpu: 0.0.40
codegen_flags: <defaults>
</compile_context>

<pallas_src>
import functools

import jax
import jax.numpy as jnp
from jax.experimental import pallas as pl
from jax.experimental.pallas import tpu as pltpu


_MASK_VALUE = -1e30            # finite "-inf": keeps the online softmax NaN-free
_TARGET_BLOCK_BYTES = 8 << 20  # ~8 MiB x-block per grid step
_MAX_TT = 8192                 # bounds the per-step score-row / intermediates
_SCORE_CHUNK = 512             # rows per MXU matvec chunk (column stays in vregs)


def _attn_pool_kernel(*refs, has_bias):
    # refs: x_ref (Tt, D) native dtype, w_ref (D, 1) f32, [bias_ref (1, Tt) f32],
    #       o_ref (1, D) native dtype,
    #       scratch: m_sc (1,1) f32, l_sc (1,1) f32, acc_sc (1, D) f32.
    if has_bias:
        x_ref, w_ref, b_ref, o_ref, m_sc, l_sc, acc_sc = refs
    else:
        x_ref, w_ref, o_ref, m_sc, l_sc, acc_sc = refs
        b_ref = None

    ti = pl.program_id(1)

    @pl.when(ti == 0)
    def _init():
        m_sc[...] = jnp.full_like(m_sc, -jnp.inf)
        l_sc[...] = jnp.zeros_like(l_sc)
        acc_sc[...] = jnp.zeros_like(acc_sc)

    Tt, D = x_ref.shape
    w = w_ref[...].astype(x_ref.dtype)                       # (D, 1), tiny cast

    # Score projection on the MXU, chunked along T so the lane-sparse
    # (chunk, 1) column stays register-resident; each chunk is relayouted
    # once (tiny XLU transpose) to a lane-dense (1, chunk) row.
    rows = []
    for lo in range(0, Tt, _SCORE_CHUNK):
        sz = min(_SCORE_CHUNK, Tt - lo)
        xc = x_ref[pl.ds(lo, sz), :]                         # (sz, D)
        col = jnp.dot(xc, w, preferred_element_type=jnp.float32)   # (sz, 1)
        rows.append(jnp.transpose(col))                      # (1, sz) lane-dense
    s = rows[0] if len(rows) == 1 else jnp.concatenate(rows, axis=1)  # (1, Tt)

    if b_ref is not None:
        s = s + b_ref[...]          # additive mask (+ T-padding) bias, lane-dense

    # Online softmax over the sequence axis on the dense (1, Tt) row, f32 stats.
    m_prev = m_sc[...]                                        # (1, 1)
    m_new = jnp.maximum(m_prev, jnp.max(s, axis=-1, keepdims=True))
    alpha = jnp.exp(m_prev - m_new)                           # rescale old stats
    e = jnp.exp(s - m_new)                                    # (1, Tt)
    l_sc[...] = alpha * l_sc[...] + jnp.sum(e, axis=-1, keepdims=True)

    # Weighted sum on the MXU: (1, Tt) @ (Tt, D) -> (1, D), f32 accumulate.
    # (For bf16 inputs e is quantized to bf16 here — standard flash-style.)
    ws = jnp.dot(e.astype(x_ref.dtype), x_ref[...],
                 preferred_element_type=jnp.float32)
    acc_sc[...] = alpha * acc_sc[...] + ws
    m_sc[...] = m_new

    @pl.when(ti == pl.num_programs(1) - 1)
    def _finalize():
        # Deferred normalization: one divide on the (1, 1) denominator.
        inv_l = pl.reciprocal(l_sc[...], approx=False)
        o_ref[...] = (acc_sc[...] * inv_l).astype(o_ref.dtype)


def _round_up(x, m):
    return ((x + m - 1) // m) * m


def _choose_tt(T, D, itemsize):
    """Sequence tile: hits the byte target with Tt a multiple of 128 (or == T)."""
    row_bytes = max(D * itemsize, 1)
    tt = _TARGET_BLOCK_BYTES // row_bytes
    tt = max(128, min(_MAX_TT, (tt // 128) * 128))
    if T <= tt:
        return T                       # whole sequence in one block, no padding
    return tt
    # TODO(synk): for very small T*D with huge B, a batch-blocked (Bb>1)
    # variant would amortize the ~0.35us per-step overhead better.


def _vmem_limit_bytes(Tt, D, itemsize):
    """Scoped-VMEM limit from the PADDED block footprints (lanes->128,
    sublanes->8/16/32 by dtype), double-buffered, + scratch + headroom."""
    d_pad = _round_up(D, 128)
    sub = {1: 32, 2: 16, 4: 8}.get(itemsize, 8)
    x_blk = _round_up(Tt, sub) * d_pad * itemsize            # (Tt, D)
    bias_blk = 8 * _round_up(Tt, 128) * 4                    # (1, Tt) f32
    out_blk = sub * d_pad * itemsize                         # (1, D)
    w_blk = _round_up(D, 8) * 128 * 4                        # (D, 1) f32
    scratch = 8 * d_pad * 4 + 2 * 8 * 128 * 4                # acc + m + l
    interm = 2 * 8 * _round_up(Tt, 128) * 4 + _SCORE_CHUNK * 512
    need = 2 * (x_blk + bias_blk + out_blk) + w_blk + scratch + interm + (4 << 20)
    return int(min(max(need, 16 << 20), 56 << 20))           # 56 MiB: v7x-safe


def attention_pooling(x, weight, bias=None, mask=None):
    """x: (B, T, D) f32/bf16; weight: (1, D); bias: (1,) or None (the scalar
    Linear bias is a no-op under softmax shift-invariance and is dropped);
    mask: (B, T) bool or None."""
    del bias  # softmax(s + c) == softmax(s): the Linear bias cancels exactly.
    B, T, D = x.shape
    itemsize = x.dtype.itemsize
    Tt = _choose_tt(T, D, itemsize)
    n_t = -(-T // Tt)
    T_pad = n_t * Tt

    w_col = weight.reshape(D, 1).astype(jnp.float32)

    x_in = x if T_pad == T else jnp.pad(x, ((0, 0), (0, T_pad - T), (0, 0)))

    need_bias = (mask is not None) or (T_pad != T)
    operands = [x_in, w_col]
    in_specs = [
        pl.BlockSpec((None, Tt, D), lambda b, t: (b, t, 0)),   # x (contiguous slab)
        pl.BlockSpec((D, 1), lambda b, t: (0, 0)),             # weight column
    ]
    if need_bias:
        # Lane-dense additive bias (0 / -1e30); padding positions are -1e30.
        # TODO(synk): a uint8 mask operand would cut this (small) HBM read 4x;
        # f32 additive chosen for lowering robustness.
        if mask is not None:
            add = jnp.where(mask.reshape(B, T), 0.0, _MASK_VALUE).astype(jnp.float32)
        else:
            add = jnp.zeros((B, T), jnp.float32)
        if T_pad != T:
            add = jnp.pad(add, ((0, 0), (0, T_pad - T)), constant_values=_MASK_VALUE)
        operands.append(add.reshape(B, 1, T_pad))
        in_specs.append(pl.BlockSpec((None, 1, Tt), lambda b, t: (b, 0, t)))

    kernel = functools.partial(_attn_pool_kernel, has_bias=need_bias)

    out = pl.pallas_call(
        kernel,
        out_shape=jax.ShapeDtypeStruct((B, 1, D), x.dtype),
        grid_spec=pltpu.PrefetchScalarGridSpec(
            num_scalar_prefetch=0,
            grid=(B, n_t),                 # batch parallel, reduction innermost
            in_specs=in_specs,
            out_specs=pl.BlockSpec((None, 1, D), lambda b, t: (b, 0, 0)),
            scratch_shapes=[
                pltpu.VMEM((1, 1), jnp.float32),   # running max m
                pltpu.VMEM((1, 1), jnp.float32),   # running denom l
                pltpu.VMEM((1, D), jnp.float32),   # running weighted sum
            ],
        ),
        compiler_params=pltpu.CompilerParams(
            dimension_semantics=("parallel", "arbitrary"),
            vmem_limit_bytes=_vmem_limit_bytes(Tt, D, itemsize),
        ),
    )(*operands)
    return out.reshape(B, D)


def _reference(x, weight, bias, mask=None):
    scores = jnp.einsum("btd,d->bt", x, weight.reshape(-1)) + bias.reshape(())
    if mask is not None:
        scores = jnp.where(mask, scores, -jnp.inf)
    p = jax.nn.softmax(scores, axis=-1)
    return jnp.sum(x * p[..., None], axis=1)


if __name__ == "__main__":
    B, T, D = 2, 8, 32  # batch, seq, d_model

    key = jax.random.PRNGKey(0)
    kx, kw, kb = jax.random.split(key, 3)

    x = jax.random.normal(kx, (B, T, D), dtype=jnp.float32)
    # nn.Linear(d_model, 1): weight (1, d_model), bias (1,)
    bound = 1.0 / (D ** 0.5)
    weight = jax.random.uniform(kw, (1, D), minval=-bound, maxval=bound,
                                dtype=jnp.float32)
    bias = jax.random.uniform(kb, (1,), minval=-bound, maxval=bound,
                              dtype=jnp.float32)
    # mask: last two positions of batch element 1 are masked out
    mask = jnp.ones((B, T), dtype=bool).at[1, -2:].set(False)

    out = jax.block_until_ready(attention_pooling(x, weight, bias, mask))
    ref = _reference(x, weight, bias, mask)
    assert out.shape == (B, D)
    assert jnp.allclose(out, ref, atol=1e-4, rtol=1e-4), \
        float(jnp.max(jnp.abs(out - ref)))

    # no-mask fast path (no bias operand at all)
    out_nm = jax.block_until_ready(attention_pooling(x, weight, bias, None))
    ref_nm = _reference(x, weight, bias, None)
    assert jnp.allclose(out_nm, ref_nm, atol=1e-4, rtol=1e-4), \
        float(jnp.max(jnp.abs(out_nm - ref_nm)))

    print("KERNEL_OK")
</pallas_src>

<mosaic_0001>
module attributes {stable_mosaic.version = 11 : i64} {
  func.func @_attn_pool_kernel(%arg0: i32, %arg1: i32, %arg2: memref<1x8x32xf32, #tpu.memory_space<vmem>>, %arg3: memref<32x1xf32, #tpu.memory_space<vmem>>, %arg4: memref<1x1x8xf32, #tpu.memory_space<vmem>>, %arg5: memref<1x1x32xf32, #tpu.memory_space<vmem>>, %arg6: memref<1x1xf32, #tpu.memory_space<vmem>>, %arg7: memref<1x1xf32, #tpu.memory_space<vmem>>, %arg8: memref<1x32xf32, #tpu.memory_space<vmem>>) attributes {dimension_semantics = [#tpu.dimension_semantics<parallel>, #tpu.dimension_semantics<arbitrary>], iteration_bounds = array<i64: 2, 1>, scalar_prefetch = 0 : i64, scratch_operands = 3 : i64, tpu.core_type = #tpu.core_type<tc>, window_params = [{transform_indices = @transform_0, window_bounds = array<i64: 1, 8, 32>}, {pipeline_mode = #tpu.pipeline_mode<synchronous>, transform_indices = @transform_1, window_bounds = array<i64: 32, 1>}, {transform_indices = @transform_2, window_bounds = array<i64: 1, 1, 8>}, {transform_indices = @transform_3, window_bounds = array<i64: 1, 1, 32>}]} {
    %c0_i32 = arith.constant 0 : i32
    %0 = arith.cmpi eq, %arg1, %c0_i32 : i32
    %1 = arith.extui %0 : i1 to i32
    %c0_i32_0 = arith.constant 0 : i32
    %2 = arith.cmpi ne, %1, %c0_i32_0 : i32
    scf.if %2 {
      %cst_28 = arith.constant 0xFF800000 : f32
      %38 = vector.broadcast %cst_28 : f32 to vector<1x1xf32>
      %c0_29 = arith.constant 0 : index
      %c0_30 = arith.constant 0 : index
      %39 = vector.load %arg6[%c0_29, %c0_30] : memref<1x1xf32, #tpu.memory_space<vmem>>, vector<1x1xf32>
      tpu.vector_store %arg6[%c0_29, %c0_30], %38 {strides = array<i32>} : memref<1x1xf32, #tpu.memory_space<vmem>>, vector<1x1xf32>,
      %cst_31 = arith.constant 0.000000e+00 : f32
      %40 = vector.broadcast %cst_31 : f32 to vector<1x1xf32>
      %c0_32 = arith.constant 0 : index
      %c0_33 = arith.constant 0 : index
      %41 = vector.load %arg7[%c0_32, %c0_33] : memref<1x1xf32, #tpu.memory_space<vmem>>, vector<1x1xf32>
      tpu.vector_store %arg7[%c0_32, %c0_33], %40 {strides = array<i32>} : memref<1x1xf32, #tpu.memory_space<vmem>>, vector<1x1xf32>,
      %cst_34 = arith.constant 0.000000e+00 : f32
      %42 = vector.broadcast %cst_34 : f32 to vector<1x32xf32>
      %c0_35 = arith.constant 0 : index
      %c0_36 = arith.constant 0 : index
      %43 = vector.load %arg8[%c0_35, %c0_36] : memref<1x32xf32, #tpu.memory_space<vmem>>, vector<1x32xf32>
      tpu.vector_store %arg8[%c0_35, %c0_36], %42 {strides = array<i32>} : memref<1x32xf32, #tpu.memory_space<vmem>>, vector<1x32xf32>,
    } else {
    }
    %c0 = arith.constant 0 : index
    %c0_1 = arith.constant 0 : index
    %3 = vector.load %arg3[%c0, %c0_1] : memref<32x1xf32, #tpu.memory_space<vmem>>, vector<32x1xf32>
    %c0_2 = arith.constant 0 : index
    %c0_3 = arith.constant 0 : index
    %c0_4 = arith.constant 0 : index
    %4 = vector.load %arg2[%c0_2, %c0_3, %c0_4] : memref<1x8x32xf32, #tpu.memory_space<vmem>>, vector<1x8x32xf32>
    %5 = vector.shape_cast %4 : vector<1x8x32xf32> to vector<8x32xf32>
    %cst = arith.constant dense<0.000000e+00> : vector<8x1xf32>
    %6 = tpu.matmul %5, %3, %cst {dimension_numbers = #tpu.dot_dimension_numbers<[1], [0], [0], [1], [0, 0, 1, 1], [], []>} : vector<8x32xf32>, vector<32x1xf32>, vector<8x1xf32> -> vector<8x1xf32>
    %7 = tpu.transpose %6, [1, 0] : vector<8x1xf32> -> vector<1x8xf32>
    %c0_5 = arith.constant 0 : index
    %c0_6 = arith.constant 0 : index
    %c0_7 = arith.constant 0 : index
    %8 = vector.load %arg4[%c0_5, %c0_6, %c0_7] : memref<1x1x8xf32, #tpu.memory_space<vmem>>, vector<1x1x8xf32>
    %9 = vector.shape_cast %8 : vector<1x1x8xf32> to vector<1x8xf32>
    %10 = arith.addf %7, %9 : vector<1x8xf32>
    %c0_8 = arith.constant 0 : index
    %c0_9 = arith.constant 0 : index
    %11 = vector.load %arg6[%c0_8, %c0_9] : memref<1x1xf32, #tpu.memory_space<vmem>>, vector<1x1xf32>
    %cst_10 = arith.constant dense<0xFF800000> : vector<1xf32>
    %12 = vector.multi_reduction <maximumf>, %10, %cst_10 [1] : vector<1x8xf32> to vector<1xf32>
    %13 = vector.shape_cast %12 : vector<1xf32> to vector<1x1xf32>
    %14 = arith.maximumf %11, %13 : vector<1x1xf32>
    %15 = arith.subf %11, %14 : vector<1x1xf32>
    %16 = math.exp %15 : vector<1x1xf32>
    %17 = vector.broadcast %14 : vector<1x1xf32> to vector<1x8xf32>
    %18 = arith.subf %10, %17 : vector<1x8xf32>
    %19 = math.exp %18 : vector<1x8xf32>
    %c0_11 = arith.constant 0 : index
    %c0_12 = arith.constant 0 : index
    %20 = vector.load %arg7[%c0_11, %c0_12] : memref<1x1xf32, #tpu.memory_space<vmem>>, vector<1x1xf32>
    %21 = arith.mulf %16, %20 : vector<1x1xf32>
    %cst_13 = arith.constant dense<0.000000e+00> : vector<1xf32>
    %22 = vector.multi_reduction <add>, %19, %cst_13 [1] : vector<1x8xf32> to vector<1xf32>
    %23 = vector.shape_cast %22 : vector<1xf32> to vector<1x1xf32>
    %24 = arith.addf %21, %23 : vector<1x1xf32>
    %c0_14 = arith.constant 0 : index
    %c0_15 = arith.constant 0 : index
    %25 = vector.load %arg7[%c0_14, %c0_15] : memref<1x1xf32, #tpu.memory_space<vmem>>, vector<1x1xf32>
    tpu.vector_store %arg7[%c0_14, %c0_15], %24 {strides = array<i32>} : memref<1x1xf32, #tpu.memory_space<vmem>>, vector<1x1xf32>,
    %c0_16 = arith.constant 0 : index
    %c0_17 = arith.constant 0 : index
    %c0_18 = arith.constant 0 : index
    %26 = vector.load %arg2[%c0_16, %c0_17, %c0_18] : memref<1x8x32xf32, #tpu.memory_space<vmem>>, vector<1x8x32xf32>
    %27 = vector.shape_cast %26 : vector<1x8x32xf32> to vector<8x32xf32>
    %cst_19 = arith.constant dense<0.000000e+00> : vector<1x32xf32>
    %28 = tpu.matmul %19, %27, %cst_19 {dimension_numbers = #tpu.dot_dimension_numbers<[1], [0], [0], [1], [0, 0, 1, 1], [], []>} : vector<1x8xf32>, vector<8x32xf32>, vector<1x32xf32> -> vector<1x32xf32>
    %c0_20 = arith.constant 0 : index
    %c0_21 = arith.constant 0 : index
    %29 = vector.load %arg8[%c0_20, %c0_21] : memref<1x32xf32, #tpu.memory_space<vmem>>, vector<1x32xf32>
    %30 = vector.broadcast %16 : vector<1x1xf32> to vector<1x32xf32>
    %31 = arith.mulf %30, %29 : vector<1x32xf32>
    %32 = arith.addf %31, %28 : vector<1x32xf32>
    %c0_22 = arith.constant 0 : index
    %c0_23 = arith.constant 0 : index
    %33 = vector.load %arg8[%c0_22, %c0_23] : memref<1x32xf32, #tpu.memory_space<vmem>>, vector<1x32xf32>
    tpu.vector_store %arg8[%c0_22, %c0_23], %32 {strides = array<i32>} : memref<1x32xf32, #tpu.memory_space<vmem>>, vector<1x32xf32>,
    %c0_24 = arith.constant 0 : index
    %c0_25 = arith.constant 0 : index
    %34 = vector.load %arg6[%c0_24, %c0_25] : memref<1x1xf32, #tpu.memory_space<vmem>>, vector<1x1xf32>
    tpu.vector_store %arg6[%c0_24, %c0_25], %14 {strides = array<i32>} : memref<1x1xf32, #tpu.memory_space<vmem>>, vector<1x1xf32>,
    %c0_i32_26 = arith.constant 0 : i32
    %35 = arith.cmpi eq, %arg1, %c0_i32_26 : i32
    %36 = arith.extui %35 : i1 to i32
    %c0_i32_27 = arith.constant 0 : i32
    %37 = arith.cmpi ne, %36, %c0_i32_27 : i32
    scf.if %37 {
      %c0_28 = arith.constant 0 : index
      %c0_29 = arith.constant 0 : index
      %38 = vector.load %arg7[%c0_28, %c0_29] : memref<1x1xf32, #tpu.memory_space<vmem>>, vector<1x1xf32>
      %39 = tpu.reciprocal %38 : vector<1x1xf32> -> vector<1x1xf32>
      %c0_30 = arith.constant 0 : index
      %c0_31 = arith.constant 0 : index
      %40 = vector.load %arg8[%c0_30, %c0_31] : memref<1x32xf32, #tpu.memory_space<vmem>>, vector<1x32xf32>
      %41 = vector.broadcast %39 : vector<1x1xf32> to vector<1x32xf32>
      %42 = arith.mulf %40, %41 : vector<1x32xf32>
      %c0_32 = arith.constant 0 : index
      %c0_33 = arith.constant 0 : index
      %c0_34 = arith.constant 0 : index
      %43 = vector.load %arg5[%c0_32, %c0_33, %c0_34] : memref<1x1x32xf32, #tpu.memory_space<vmem>>, vector<1x1x32xf32>
      %44 = vector.shape_cast %43 : vector<1x1x32xf32> to vector<1x32xf32>
      %45 = vector.shape_cast %42 : vector<1x32xf32> to vector<1x1x32xf32>
      tpu.vector_store %arg5[%c0_32, %c0_33, %c0_34], %45 {strides = array<i32>} : memref<1x1x32xf32, #tpu.memory_space<vmem>>, vector<1x1x32xf32>,
    } else {
    }
    return
  }
  func.func @transform_0(%arg0: i32, %arg1: i32) -> (i32, i32, i32) {
    %c0_i32 = arith.constant 0 : i32
    %c0_i32_0 = arith.constant 0 : i32
    return %arg0, %arg1, %c0_i32 : i32, i32, i32
  }
  func.func @transform_1(%arg0: i32, %arg1: i32) -> (i32, i32) {
    %c0_i32 = arith.constant 0 : i32
    %c0_i32_0 = arith.constant 0 : i32
    %c0_i32_1 = arith.constant 0 : i32
    return %c0_i32, %c0_i32_0 : i32, i32
  }
  func.func @transform_2(%arg0: i32, %arg1: i32) -> (i32, i32, i32) {
    %c0_i32 = arith.constant 0 : i32
    %c0_i32_0 = arith.constant 0 : i32
    return %arg0, %c0_i32, %arg1 : i32, i32, i32
  }
  func.func @transform_3(%arg0: i32, %arg1: i32) -> (i32, i32, i32) {
    %c0_i32 = arith.constant 0 : i32
    %c0_i32_0 = arith.constant 0 : i32
    %c0_i32_1 = arith.constant 0 : i32
    return %arg0, %c0_i32, %c0_i32_0 : i32, i32, i32
  }
}

</mosaic_0001>

<llo_original>
// kernel: tpu_custom_call.1
$region0: #{tpu_custom_call.1}
  #allocation0 [shape = 'u32[]', space=smem, size = 0x4, offset = 0x4, fixed_abs, tag = 'smem constant byte address 0x4 - core index']
  #allocation1 [shape = 'u32[72,128]{1,0:T(1,128)}', space=vmem, size = 0x9000, scoped, tag = 'internal scratch']
  #allocation2 [shape = 'f32[1,1]{1,0:T(1,128)}', space=vmem, size = 0x200, scoped, tag = 'scratch operand']
  #allocation3 [shape = 'f32[1,1]{1,0:T(1,128)}', space=vmem, size = 0x200, scoped, tag = 'scratch operand']
  #allocation4 [shape = 'f32[1,32]{1,0:T(1,128)}', space=vmem, size = 0x200, scoped, tag = 'scratch operand']
  %s0 = inlined_call_operand.vmem [shape: f32[2,8,32], index: 0, kind: input, shape index: {}]
  %s1 = inlined_call_operand.vmem [shape: f32[32,1], index: 1, kind: input, shape index: {}]
  %s2 = inlined_call_operand.vmem [shape: f32[2,1,8], index: 2, kind: input, shape index: {}]
  %s3 = inlined_call_operand.hbm [shape: f32[2,1,32], index: 3, kind: output, shape index: {}]
  %s4 = sld [smem:[#allocation0]]
  $region53: #{tpu_custom_call.1} parent=0
    _
  %s6 = ssub.s32 1, %s4
  %s7 = scalar_select 0, %s6, %s4
  $region1: #{tpu_custom_call.1} parent=0
    #allocation5 [shape = 'u8[1024]{0}', space=vmem, size = 0x400, scoped, tag = 'output window, operand 0']
    #allocation6 [shape = 's32[2]{0}', space=sflag, size = 0x8, scoped, tag = 'scoped memory for tpu_custom_call.1']
    %8 = vsyncpa [#allocation6], 0
    %s9 = scalar_lea.sflag [#allocation6], 1
    %10 = vsyncpa %s9, 0
    loop: start=0, step=1, limit=4
    $region2: #{tpu_custom_call.1} parent=1 // loop_pre_header
      _
    $region3: #{tpu_custom_call.1} parent=1 // loop_header
      %s12 = sphi 0, %s16
      %p13 = scmp.ge.s32.totalorder %s12, 4
      %s19 = sphi 0, %s31
      %s20 = sphi 0, %s27
      %s21 = sphi 0, %s19
      %s22 = sphi 0, %s20
      %s23 = sphi 0, %s21
      %s24 = sphi 0, %s22
      %s36 = sphi 0, %s38
      %s39 = sphi 0, %s36
      %s40 = sphi 0, %s39
      %s56 = sphi 0, %s40
      %s60 = sphi 0, %s60
      %s62 = sphi 0, %s60
      %s63 = sphi 0, %s62
      %s77 = sphi 0, %s63
      %s85 = sphi 0, %s87
      %s88 = sphi 0, %s85
      %s89 = sphi 0, %s88
      %s105 = sphi 0, %s89
      %s111 = sphi 0, %s113
      %s114 = sphi 0, %s111
      %s115 = sphi 0, %s114
      %s131 = sphi 0, %s115
    $region4: #{tpu_custom_call.1} parent=1 // loop_header_branch
      %15 = sbr.rel (%p13) target = $region8
    $region5: #{tpu_custom_call.1} parent=1 // loop_body
      %s17 = ssub.s32 %s12, 1
      %s18 = ssub.s32 %s12, 2
      %s25 = sadd.s32 1, %s20
      %p26 = scmp.ge.s32.totalorder %s25, 1
      %s27 = scalar_select %p26, 0, %s25
      %s28 = sadd.s32 1, %s19
      %s29 = scalar_select %p26, %s28, %s19
      %p30 = scmp.ge.s32.totalorder %s29, 2
      %s31 = scalar_select %p30, 0, %s29
      %s32 = ssub.s32 %s19, %s31
      %s33 = ssub.s32 %s20, %s27
      %s34 = sor.u32 %s32, %s33
      %p35 = scmp.eq.s32.totalorder %s34, 0
      %s37 = sadd.s32 %s36, 1
      %s38 = scalar_select %p35, %s36, %s37
      %p41 = pneg %p35
      %p42 = scmp.eq.s32.totalorder %s12, 1
      %p43 = por %p41, %p42
      %p44 = scmp.ne.s32.totalorder %s36, %s39
      %p45 = scmp.eq.s32.totalorder %s12, 0
      %p46 = por %p44, %p45
      %p47 = scmp.ne.s32.totalorder %s36, %s39
      %p48 = scmp.eq.s32.totalorder %s17, 1
      %p49 = por %p47, %p48
      %p50 = scmp.ne.s32.totalorder %s39, %s40
      %p51 = scmp.eq.s32.totalorder %s17, 0
      %p52 = por %p50, %p51
      %p53 = scmp.ne.s32.totalorder %s39, %s40
      %p54 = scmp.eq.s32.totalorder %s18, 1
      %p55 = por %p53, %p54
      %p57 = scmp.ne.s32.totalorder %s40, %s56
      %p58 = scmp.eq.s32.totalorder %s18, 0
      %p59 = por %p57, %p58
      %s61 = sadd.s32 %s60, 1
      %p64 = scmp.eq.s32.totalorder %s12, 1
      %p65 = scmp.ne.s32.totalorder %s60, %s62
      %p66 = scmp.eq.s32.totalorder %s12, 0
      %p67 = por %p65, %p66
      %p68 = scmp.ne.s32.totalorder %s60, %s62
      %p69 = scmp.eq.s32.totalorder %s17, 1
      %p70 = por %p68, %p69
      %p71 = scmp.ne.s32.totalorder %s62, %s63
      %p72 = scmp.eq.s32.totalorder %s17, 0
      %p73 = por %p71, %p72
      %p74 = scmp.ne.s32.totalorder %s62, %s63
      %p75 = scmp.eq.s32.totalorder %s18, 1
      %p76 = por %p74, %p75
      %p78 = scmp.ne.s32.totalorder %s63, %s77
      %p79 = scmp.eq.s32.totalorder %s18, 0
      %p80 = por %p78, %p79
      %s81 = ssub.s32 %s19, %s31
      %s82 = ssub.s32 %s20, %s27
      %s83 = sor.u32 %s81, %s82
      %p84 = scmp.eq.s32.totalorder %s83, 0
      %s86 = sadd.s32 %s85, 1
      %s87 = scalar_select %p84, %s85, %s86
      %p90 = pneg %p84
      %p91 = scmp.eq.s32.totalorder %s12, 1
      %p92 = por %p90, %p91
      %p93 = scmp.ne.s32.totalorder %s85, %s88
      %p94 = scmp.eq.s32.totalorder %s12, 0
      %p95 = por %p93, %p94
      %p96 = scmp.ne.s32.totalorder %s85, %s88
      %p97 = scmp.eq.s32.totalorder %s17, 1
      %p98 = por %p96, %p97
      %p99 = scmp.ne.s32.totalorder %s88, %s89
      %p100 = scmp.eq.s32.totalorder %s17, 0
      %p101 = por %p99, %p100
      %p102 = scmp.ne.s32.totalorder %s88, %s89
      %p103 = scmp.eq.s32.totalorder %s18, 1
      %p104 = por %p102, %p103
      %p106 = scmp.ne.s32.totalorder %s89, %s105
      %p107 = scmp.eq.s32.totalorder %s18, 0
      %p108 = por %p106, %p107
      %s109 = ssub.s32 %s19, %s31
      %p110 = scmp.eq.s32.totalorder %s109, 0
      %s112 = sadd.s32 %s111, 1
      %s113 = scalar_select %p110, %s111, %s112
      %p116 = pneg %p110
      %p117 = scmp.eq.s32.totalorder %s12, 1
      %p118 = por %p116, %p117
      %p119 = scmp.ne.s32.totalorder %s111, %s114
      %p120 = scmp.eq.s32.totalorder %s12, 0
      %p121 = por %p119, %p120
      %p122 = scmp.ne.s32.totalorder %s111, %s114
      %p123 = scmp.eq.s32.totalorder %s17, 1
      %p124 = por %p122, %p123
      %p125 = scmp.ne.s32.totalorder %s114, %s115
      %p126 = scmp.eq.s32.totalorder %s17, 0
      %p127 = por %p125, %p126
      %p128 = scmp.ne.s32.totalorder %s114, %s115
      %p129 = scmp.eq.s32.totalorder %s18, 1
      %p130 = por %p128, %p129
      %p132 = scmp.ne.s32.totalorder %s115, %s131
      %p133 = scmp.eq.s32.totalorder %s18, 0
      %p134 = por %p132, %p133
      %p135 = scmp.le.s32.totalorder 1, %s12
      %p136 = scmp.lt.s32.totalorder %s12, 3
      %p137 = pnand %p135, %p136
      %p138 = pneg %p137
      // Predicated region
      $region9: #{tpu_custom_call.1} parent=5 // pred_check
        _
      $region10: #{tpu_custom_call.1} parent=5 // pred_check_branch
        %140 = sbr.rel (%p137) target = $region12
      $region11: #{tpu_custom_call.1} parent=5 // pred_region
        %s141 = ssub.s32 %s12, 1
        // Predicated region
        $region13: #{tpu_custom_call.1} parent=11 // pred_check
          %p142 = pneg %p73
        $region14: #{tpu_custom_call.1} parent=11 // pred_check_branch
          %144 = sbr.rel (%p142) target = $region16
        $region15: #{tpu_custom_call.1} parent=11 // pred_region
          _
        $region16: #{tpu_custom_call.1} parent=11 // pred_fallthru
          _
      $region12: #{tpu_custom_call.1} parent=5 // pred_fallthru
        _
      %p145 = scmp.lt.s32.totalorder %s12, 2
      // Predicated region
      $region17: #{tpu_custom_call.1} parent=5 // pred_check
        %p146 = pneg %p145
      $region18: #{tpu_custom_call.1} parent=5 // pred_check_branch
        %148 = sbr.rel (%p146) target = $region20
      $region19: #{tpu_custom_call.1} parent=5 // pred_region
        // Predicated region
        $region21: #{tpu_custom_call.1} parent=19 // pred_check
          %p149 = pneg %p46
        $region22: #{tpu_custom_call.1} parent=19 // pred_check_branch
          %151 = sbr.rel (%p149) target = $region24
        $region23: #{tpu_custom_call.1} parent=19 // pred_region
          %p152 = scmp.lt.s32.totalorder %s19, 1
          %s153 = scalar_select %p152, %s19, 1
          %p154 = scmp.lt.s32.totalorder %s20, 0
          %s155 = scalar_select %p154, %s20, 0
          %s156 = sadd.s32 %s155, %s153
          %s157 = smul.addr %s156, 8
          %s158 = scalar_lea.vmem %s0, %s157
        $region24: #{tpu_custom_call.1} parent=19 // pred_fallthru
          _
        // Predicated region
        $region25: #{tpu_custom_call.1} parent=19 // pred_check
          %p159 = pneg %p95
        $region26: #{tpu_custom_call.1} parent=19 // pred_check_branch
          %161 = sbr.rel (%p159) target = $region28
        $region27: #{tpu_custom_call.1} parent=19 // pred_region
          %p162 = scmp.lt.s32.totalorder %s19, 1
          %s163 = scalar_select %p162, %s19, 1
          %p164 = scmp.lt.s32.totalorder %s20, 0
          %s165 = scalar_select %p164, %s20, 0
          %s166 = sadd.s32 %s165, %s163
          %s167 = scalar_lea.vmem %s2, %s166
        $region28: #{tpu_custom_call.1} parent=19 // pred_fallthru
          _
      $region20: #{tpu_custom_call.1} parent=5 // pred_fallthru
        _
      %p168 = scmp.le.s32.totalorder 1, %s12
      %p169 = scmp.lt.s32.totalorder %s12, 3
      %p170 = pnand %p168, %p169
      %p171 = pneg %p170
      // Predicated region
      $region29: #{tpu_custom_call.1} parent=5 // pred_check
        _
      $region30: #{tpu_custom_call.1} parent=5 // pred_check_branch
        %173 = sbr.rel (%p170) target = $region32
      $region31: #{tpu_custom_call.1} parent=5 // pred_region
        %s174 = ssub.s32 %s12, 1
        %p175 = scmp.lt.s32.totalorder %s21, 1
        %s176 = scalar_select %p175, %s21, 1
        %p177 = scmp.lt.s32.totalorder %s22, 0
        %s178 = scalar_select %p177, %s22, 0
        %s179 = sadd.s32 %s178, %s176
        %s180 = smul.addr %s179, 8
        %s181 = scalar_lea.vmem %s0, %s180
        %p182 = pneg %p52
        %p183 = pneg %p49
        %p184 = pneg %p73
        %p185 = pneg %p70
        %p186 = scmp.lt.s32.totalorder %s21, 1
        %s187 = scalar_select %p186, %s21, 1
        %p188 = scmp.lt.s32.totalorder %s22, 0
        %s189 = scalar_select %p188, %s22, 0
        %s190 = sadd.s32 %s189, %s187
        %s191 = scalar_lea.vmem %s2, %s190
        %p192 = pneg %p101
        %p193 = pneg %p98
        %p194 = pneg %p127
        %p195 = pneg %p124
        %s196 = sand.u32 %s114, 1
        %s197 = scalar_lea.sflag [#allocation6], %s196
        %s198 = sand.u32 %s114, 1
        %s199 = scalar_lea.vmem [#allocation5], %s198
        %p200 = scmp.lt.s32.totalorder %s21, 1
        %s201 = scalar_select %p200, %s21, 1
        %p202 = scmp.lt.s32.totalorder %s22, 0
        %s203 = scalar_select %p202, %s22, 0
        %s204 = sadd.s32 %s203, %s201
        %s205 = smul.addr %s204, 8
        %s206 = scalar_lea.vmem %s0, %s205
        %p207 = scmp.lt.s32.totalorder %s21, 1
        %s208 = scalar_select %p207, %s21, 1
        %p209 = scmp.lt.s32.totalorder %s22, 0
        %s210 = scalar_select %p209, %s22, 0
        %s211 = sadd.s32 %s210, %s208
        %s212 = scalar_lea.vmem %s2, %s211
        %p213 = scmp.eq.s32.totalorder %s22, 0
        // Predicated region
        $region33: #{tpu_custom_call.1} parent=31 // pred_check
          %p214 = pneg %p213
        $region34: #{tpu_custom_call.1} parent=31 // pred_check_branch
          %216 = sbr.rel (%p214) target = $region36
        $region35: #{tpu_custom_call.1} parent=31 // pred_region
          %vm217 = vcmask 0
          %218 = vst.msk [vmem:[#allocation2] sm:$0x1] %vm217, -inf
          %219 = vst.msk [vmem:[#allocation3] sm:$0x1] %vm217, 0.0
          %vm220 = vcmask 253952
          %221 = vst.msk [vmem:[#allocation4] sm:$0x1] %vm220, 0.0
        $region36: #{tpu_custom_call.1} parent=31 // pred_fallthru
          _
        %v222 = vld [vmem:[%s1] sm:$0xff]
        %v223 = vld [vmem:[%s1 + $0x8] sm:$0xff]
        %v224 = vld [vmem:[%s1 + $0x10] sm:$0xff]
        %v225 = vld [vmem:[%s1 + $0x18] sm:$0xff]
        %v226 = vld [vmem:[%s206] sm:$0xff]
        %vm227 = vcmask 261120
        %v229 = vsel %vm227, %v226, 0
        %231 = vmatpush.msra.mxu0 0.0
        %232 = vmatpush.msra.mxu0 0.0
        %233 = vmatpush.msra.mxu0 0.0
        %234 = vmatpush.msra.mxu0 0.0
        %235 = vmatpush.msra.mxu0 0.0
        %236 = vmatpush.msra.mxu0 0.0
        %237 = vmatpush.msra.mxu0 0.0
        %238 = vmatpush.msra.mxu0 0.0
        %239 = vmatpush.msra.mxu0 0.0
        %240 = vmatpush.msra.mxu0 0.0
        %241 = vmatpush.msra.mxu0 0.0
        %242 = vmatpush.msra.mxu0 0.0
        %243 = vmatpush.msra.mxu0 %v225
        %244 = vmatpush.msra.mxu0 %v224
        %245 = vmatpush.msra.mxu0 %v223
        %246 = vmatpush.msra.mxu0 %v222
        %247 = vmatmul.f32.gmra.mxu0 %v229
        %v248 = vpop.f32.mrf.mxu0
        %v249 = vadd.f32 0.0, %v248
        %250 = vdwg.mxu0
        %251 = vxpose.xlu0.b32.start [1/16] %v249, 128
        %252 = vxpose.xlu0.b32.cont [2/16] 0.0, 128
        %253 = vxpose.xlu0.b32.cont [3/16] 0.0, 128
        %254 = vxpose.xlu0.b32.cont [4/16] 0.0, 128
        %255 = vxpose.xlu0.b32.cont [5/16] 0.0, 128
        %256 = vxpose.xlu0.b32.cont [6/16] 0.0, 128
        %257 = vxpose.xlu0.b32.cont [7/16] 0.0, 128
        %258 = vxpose.xlu0.b32.cont [8/16] 0.0, 128
        %259 = vxpose.xlu0.b32.cont [9/16] 0.0, 128
        %260 = vxpose.xlu0.b32.cont [10/16] 0.0, 128
        %261 = vxpose.xlu0.b32.cont [11/16] 0.0, 128
        %262 = vxpose.xlu0.b32.cont [12/16] 0.0, 128
        %263 = vxpose.xlu0.b32.cont [13/16] 0.0, 128
        %264 = vxpose.xlu0.b32.cont [14/16] 0.0, 128
        %265 = vxpose.xlu0.b32.cont [15/16] 0.0, 128
        %266 = vxpose.xlu0.b32.end [16/16] 0.0, 128
        %v267 = vpop.trf.xlu0
        %v268 = vpop.trf.xlu0
        %v269 = vpop.trf.xlu0
        %v270 = vpop.trf.xlu0
        %v271 = vpop.trf.xlu0
        %v272 = vpop.trf.xlu0
        %v273 = vpop.trf.xlu0
        %v274 = vpop.trf.xlu0
        %v275 = vpop.trf.xlu0
        %v276 = vpop.trf.xlu0
        %v277 = vpop.trf.xlu0
        %v278 = vpop.trf.xlu0
        %v279 = vpop.trf.xlu0
        %v280 = vpop.trf.xlu0
        %v281 = vpop.trf.xlu0
        %v282 = vpop.trf.xlu0
        %v283 = vld [vmem:[%s212] sm:$0x1]
        %v284 = vadd.f32 %v267, %v283
        %v285 = vld [vmem:[#allocation2] sm:$0x1]
        %vm286 = vcmask 57344
        %v287 = vsel %vm286, %v284, -inf
        %288 = vmax.xlane.f32.xlu0 %v287
        %v289 = vpop.xlane.xlu0 %288
        %v290 = vmax.f32 %v285, %v289
        %v291 = vsub.f32 %v285, %v290
        %v292 = vmul.f32 %v291, 1.442695
        %v293 = vpow.pop %v292
        %295 = vset.pattern.permute.xlu0 0
        %296 = vperm.xlu0 %295, %v290
        %v297 = vpop.permute.xlu0 %296
        %v299 = vperm.slane %v297, 0
        %v300 = vsub.f32 %v284, %v299
        %v301 = vmul.f32 %v300, 1.442695
        %v302 = vpow.pop %v301
        %v303 = vld [vmem:[#allocation3] sm:$0x1]
        %v304 = vmul.f32 %v293, %v303
        %v305 = vsel %vm286, %v302, 0.0
        %306 = vadd.xlane.f32.xlu0 %v305
        %v307 = vpop.xlane.xlu0 %306
        %v308 = vadd.f32 %v304, %v307
        %vm309 = vcmask 0
        %310 = vst.msk [vmem:[#allocation3] sm:$0x1] %vm309, %v308
        %v311 = vld [vmem:[%s206] sm:$0xff]
        %vm312 = vcmask 64512
        %v314 = vsel %vm312, %v302, 0
        %316 = vmatpush.msra.mxu0 0.0
        %317 = vmatpush.msra.mxu0 0.0
        %318 = vmatpush.msra.mxu0 0.0
        %319 = vmatpush.msra.mxu0 0.0
        %320 = vmatpush.msra.mxu0 0.0
        %321 = vmatpush.msra.mxu0 0.0
        %322 = vmatpush.msra.mxu0 0.0
        %323 = vmatpush.msra.mxu0 0.0
        %324 = vmatpush.msra.mxu0 0.0
        %325 = vmatpush.msra.mxu0 0.0
        %326 = vmatpush.msra.mxu0 0.0
        %327 = vmatpush.msra.mxu0 0.0
        %328 = vmatpush.msra.mxu0 0.0
        %329 = vmatpush.msra.mxu0 0.0
        %330 = vmatpush.msra.mxu0 0.0
        %331 = vmatpush.msra.mxu0 %v311
        %332 = vmatmul.f32.gmra.mxu0 %v314
        %v333 = vpop.f32.mrf.mxu0
        %v334 = vadd.f32 0.0, %v333
        %335 = vdwg.mxu0
        %v336 = vld [vmem:[#allocation4] sm:$0x1]
        %338 = vset.pattern.permute.xlu0 0
        %339 = vperm.xlu0 %338, %v293
        %v340 = vpop.permute.xlu0 %339
        %v342 = vperm.slane %v340, 0
        %v343 = vmul.f32 %v342, %v336
        %v344 = vadd.f32 %v343, %v334
        %vm345 = vcmask 253952
        %346 = vst.msk [vmem:[#allocation4] sm:$0x1] %vm345, %v344
        %347 = vst.msk [vmem:[#allocation2] sm:$0x1] %vm309, %v290
        // Predicated region
        $region37: #{tpu_custom_call.1} parent=31 // pred_check
          %p348 = pneg %p213
        $region38: #{tpu_custom_call.1} parent=31 // pred_check_branch
          %350 = sbr.rel (%p348) target = $region40
        $region39: #{tpu_custom_call.1} parent=31 // pred_region
          %v351 = vld [vmem:[#allocation3] sm:$0x1]
          %v352 = vrcp.pop %v351
          %v353 = vmul.f32 %v351, %v352
          %v354 = vsub.f32 1.0, %v353
          %v355 = vmul.f32 %v352, %v354
          %v356 = vadd.f32 %v352, %v355
          %vm357 = vweird.f32 %v351
          %vm358 = vweird.f32 %v352
          %vm359 = vmor %vm357, %vm358
          %v360 = vsel %vm359, %v352, %v356
          %v361 = vand.u32 2147483647, %v351
          %vm362 = vcmp.eq.f32.partialorder %v361, 8.507059e+37
          %v363 = vand.u32 %v351, 2147483648
          %v364 = vor.u32 1.1754944e-38, %v363
          %v365 = vsel %vm362, %v364, %v360
          %v366 = vld [vmem:[#allocation4] sm:$0x1]
          %368 = vset.pattern.permute.xlu0 0
          %369 = vperm.xlu0 %368, %v365
          %v370 = vpop.permute.xlu0 %369
          %v372 = vperm.slane %v370, 0
          %v373 = vmul.f32 %v366, %v372
          %374 = vst.msk [vmem:[%s199] sm:$0x1] %vm345, %v373
        $region40: #{tpu_custom_call.1} parent=31 // pred_fallthru
          _
        %s375 = sand.u32 %s114, 1
        %s376 = scalar_lea.sflag [#allocation6], %s375
        %s377 = sand.u32 %s114, 1
        %s378 = scalar_lea.vmem [#allocation5], %s377
        // Predicated region
        $region41: #{tpu_custom_call.1} parent=31 // pred_check
          %p379 = pneg %p124
        $region42: #{tpu_custom_call.1} parent=31 // pred_check_branch
          %381 = sbr.rel (%p379) target = $region44
        $region43: #{tpu_custom_call.1} parent=31 // pred_region
          %383 = vsyncadd %s376, 0
          %s384 = scalar_lea.hbm %s3, %s21
          %s386 = sshll.u32 %s378, 4
          %s387 = int_to_ptr.vmem [resolvable:$true] %s386
          %s388 = sshll.u32 %s384, 4
          %s389 = int_to_ptr.hbm [resolvable:$true] %s388
          %391 = dma.vmem_to_hbm [thread:$0]  %s387, 16, %s389, %s376
        $region44: #{tpu_custom_call.1} parent=31 // pred_fallthru
          _
      $region32: #{tpu_custom_call.1} parent=5 // pred_fallthru
        _
      %p392 = scmp.le.s32.totalorder 2, %s12
      // Predicated region
      $region45: #{tpu_custom_call.1} parent=5 // pred_check
        %p393 = pneg %p392
      $region46: #{tpu_custom_call.1} parent=5 // pred_check_branch
        %395 = sbr.rel (%p393) target = $region48
      $region47: #{tpu_custom_call.1} parent=5 // pred_region
        %s396 = ssub.s32 %s12, 2
        // Predicated region
        $region49: #{tpu_custom_call.1} parent=47 // pred_check
          %p397 = pneg %p130
        $region50: #{tpu_custom_call.1} parent=47 // pred_check_branch
          %399 = sbr.rel (%p397) target = $region52
        $region51: #{tpu_custom_call.1} parent=47 // pred_region
          %s400 = sand.u32 %s115, 1
          %s401 = scalar_lea.sflag [#allocation6], %s400
          %s402 = sand.u32 %s115, 1
          %s403 = scalar_lea.vmem [#allocation5], %s402
          %405 = dma.done %s401, 16
        $region52: #{tpu_custom_call.1} parent=47 // pred_fallthru
          _
      $region48: #{tpu_custom_call.1} parent=5 // pred_fallthru
        _
    $region6: #{tpu_custom_call.1} parent=1 // loop_footer
      %s16 = sadd.s32 1, %s12
    $region7: #{tpu_custom_call.1} parent=1 // loop_footer_branch
      %11 = sbr.rel target = $region3
    $region8: #{tpu_custom_call.1} parent=1 // loop_exit
      _
    %406 = vsyncpa [#allocation6], 1
    %s407 = scalar_lea.sflag [#allocation6], 1
    %408 = vsyncpa %s407, 1

</llo_original>
